<compile_context>
chip_gen: v5e
topology: v5e:2x2
jax: 0.10.0
libtpu: 0.0.40
codegen_flags: <defaults>
</compile_context>

<pallas_src>
import functools

import jax
import jax.numpy as jnp
from jax.experimental import pallas as pl
from jax.experimental.pallas import tpu as pltpu


def _round_up(x: int, m: int) -> int:
    return ((x + m - 1) // m) * m


def _cdiv(a: int, b: int) -> int:
    return (a + b - 1) // b


def qnet_kernel(x_ref, w1_ref, b1_ref, w2_ref, b2_ref, o_ref):
    # Hidden layer: x @ w1 + b1, ReLU.  x_ref is (tile_b, in_size) with the
    # true (unpadded) feature width; the MXU pads the K=11 contraction itself.
    h = jnp.dot(x_ref[...], w1_ref[...], preferred_element_type=jnp.float32)
    h = jnp.maximum(h + b1_ref[...], 0.0)
    # Output layer: h @ w2 + b2 (lane-dense 128-wide padded output block).
    out = jnp.dot(h, w2_ref[...], preferred_element_type=jnp.float32)
    out = out + b2_ref[...]
    o_ref[...] = out.astype(o_ref.dtype)


def prepare_params(w1, b1, w2, b2):
    """Pad parameters once (hidden/output lane dims -> multiples of 128).

    Call this outside the training/inference hot path and pass the padded
    params to qnet_forward.  Padding is exact: padded hidden columns get
    zero weights/bias -> relu(0)=0, and they multiply zero rows of w2;
    padded output columns are sliced off in qnet_forward.
    """
    in_size, hidden = w1.shape
    out_size = w2.shape[1]
    h_p = _round_up(hidden, 128)
    out_p = _round_up(out_size, 128)
    w1p = jnp.pad(w1, ((0, 0), (0, h_p - hidden)))
    b1p = jnp.pad(b1, ((0, 0), (0, h_p - hidden)))
    w2p = jnp.pad(w2, ((0, h_p - hidden), (0, out_p - out_size)))
    b2p = jnp.pad(b2, ((0, 0), (0, out_p - out_size)))
    return w1p, b1p, w2p, b2p


@functools.partial(jax.jit, static_argnames=("out_size", "block_b"))
def qnet_forward(x, w1p, b1p, w2p, b2p, *, out_size: int, block_b: int = 2048):
    """Forward pass of QNet.

    x   : (B, input_size) f32
    w1p : (input_size, hidden_p)  padded params from prepare_params
    b1p : (1, hidden_p)
    w2p : (hidden_p, output_p)
    b2p : (1, output_p)
    Returns (B, out_size) f32.
    """
    B, in_size = x.shape
    h_p = w1p.shape[1]
    out_p = w2p.shape[1]

    # Balanced batch tiles: as few, equally-sized tiles as possible (each a
    # multiple of 8 sublanes, at most ~block_b rows).  Small batches collapse
    # to grid=(1,); awkward batches waste <=7 padded rows per tile.
    b8 = _round_up(B, 8)
    n_tiles = _cdiv(b8, _round_up(block_b, 8))
    tile_b = _round_up(_cdiv(b8, n_tiles), 8)
    b_pad = n_tiles * tile_b

    # Pad the batch dim only -- feature dim of x stays at its true width.
    xp = jnp.pad(x, ((0, b_pad - B), (0, 0)))

    out_padded = pl.pallas_call(
        qnet_kernel,
        out_shape=jax.ShapeDtypeStruct((b_pad, out_p), x.dtype),
        grid=(n_tiles,),
        in_specs=[
            # x: tiled over batch; last block dim == full array dim (legal).
            pl.BlockSpec((tile_b, in_size), lambda i: (i, 0)),
            pl.BlockSpec((in_size, h_p), lambda i: (0, 0)),  # w1: VMEM-resident
            pl.BlockSpec((1, h_p), lambda i: (0, 0)),        # b1
            pl.BlockSpec((h_p, out_p), lambda i: (0, 0)),    # w2
            pl.BlockSpec((1, out_p), lambda i: (0, 0)),      # b2
        ],
        out_specs=pl.BlockSpec((tile_b, out_p), lambda i: (i, 0)),
        compiler_params=pltpu.CompilerParams(
            # No-op at grid=(1,); shards 2+ batch tiles across TCs on v7x.
            dimension_semantics=("parallel",)),
    )(xp, w1p, b1p, w2p, b2p)

    return out_padded[:B, :out_size]


def init_qnet_params(key, input_size, hidden_size, output_size, dtype=jnp.float32):
    """Deterministic init mimicking PyTorch nn.Linear default (U(+/- 1/sqrt(fan_in)))."""
    k1, k2, k3, k4 = jax.random.split(key, 4)
    bound1 = 1.0 / (input_size ** 0.5)
    bound2 = 1.0 / (hidden_size ** 0.5)
    # Stored transposed relative to PyTorch (in, out) so the kernel does x @ w.
    w1 = jax.random.uniform(k1, (input_size, hidden_size), dtype, -bound1, bound1)
    b1 = jax.random.uniform(k2, (1, hidden_size), dtype, -bound1, bound1)
    w2 = jax.random.uniform(k3, (hidden_size, output_size), dtype, -bound2, bound2)
    b2 = jax.random.uniform(k4, (1, output_size), dtype, -bound2, bound2)
    return w1, b1, w2, b2


def _reference(x, w1, b1, w2, b2):
    return jnp.maximum(x @ w1 + b1, 0.0) @ w2 + b2


if __name__ == "__main__":
    # Snake-like QNet sizes: state vector of 11, hidden 32, 3 actions.
    input_size, hidden_size, output_size = 11, 32, 3

    key = jax.random.PRNGKey(0)
    kx, kp, kx2 = jax.random.split(key, 3)
    w1, b1, w2, b2 = init_qnet_params(kp, input_size, hidden_size, output_size)

    # Pad the parameters ONCE, outside the hot path.
    w1p, b1p, w2p, b2p = prepare_params(w1, b1, w2, b2)

    # Small RL-style batch (collapses to a single grid step).
    x_small = jax.random.normal(kx, (2, input_size), dtype=jnp.float32)
    out_small = jax.block_until_ready(
        qnet_forward(x_small, w1p, b1p, w2p, b2p, out_size=output_size))
    ref_small = _reference(x_small, w1, b1, w2, b2)
    assert out_small.shape == (2, output_size)
    assert jnp.allclose(out_small, ref_small, atol=1e-5, rtol=1e-5)

    # Larger, non-multiple batch: balanced tiling gives one 304-row tile.
    x_big = jax.random.normal(kx2, (300, input_size), dtype=jnp.float32)
    out_big = jax.block_until_ready(
        qnet_forward(x_big, w1p, b1p, w2p, b2p, out_size=output_size))
    ref_big = _reference(x_big, w1, b1, w2, b2)
    assert out_big.shape == (300, output_size)
    assert jnp.allclose(out_big, ref_big, atol=1e-5, rtol=1e-5)

    # Exercise the multi-tile path (grid > 1) with a small block_b to make
    # sure the balanced-tiling + batch-grid logic is correct.
    x_multi = jax.random.normal(kx2, (300, input_size), dtype=jnp.float32)
    out_multi = jax.block_until_ready(
        qnet_forward(x_multi, w1p, b1p, w2p, b2p, out_size=output_size, block_b=128))
    ref_multi = _reference(x_multi, w1, b1, w2, b2)
    assert out_multi.shape == (300, output_size)
    assert jnp.allclose(out_multi, ref_multi, atol=1e-5, rtol=1e-5)

    print("KERNEL_OK")
</pallas_src>

<mosaic_0001>
module attributes {stable_mosaic.version = 11 : i64} {
  func.func @qnet_kernel(%arg0: i32, %arg1: memref<8x11xf32, #tpu.memory_space<vmem>>, %arg2: memref<11x128xf32, #tpu.memory_space<vmem>>, %arg3: memref<1x128xf32, #tpu.memory_space<vmem>>, %arg4: memref<128x128xf32, #tpu.memory_space<vmem>>, %arg5: memref<1x128xf32, #tpu.memory_space<vmem>>, %arg6: memref<8x128xf32, #tpu.memory_space<vmem>>) attributes {dimension_semantics = [#tpu.dimension_semantics<parallel>], iteration_bounds = array<i64: 1>, scalar_prefetch = 0 : i64, scratch_operands = 0 : i64, tpu.core_type = #tpu.core_type<tc>, window_params = [{transform_indices = @transform_0, window_bounds = array<i64: 8, 11>}, {pipeline_mode = #tpu.pipeline_mode<synchronous>, transform_indices = @transform_1, window_bounds = array<i64: 11, 128>}, {pipeline_mode = #tpu.pipeline_mode<synchronous>, transform_indices = @transform_2, window_bounds = array<i64: 1, 128>}, {pipeline_mode = #tpu.pipeline_mode<synchronous>, transform_indices = @transform_3, window_bounds = array<i64: 128, 128>}, {pipeline_mode = #tpu.pipeline_mode<synchronous>, transform_indices = @transform_4, window_bounds = array<i64: 1, 128>}, {transform_indices = @transform_5, window_bounds = array<i64: 8, 128>}]} {
    %c0 = arith.constant 0 : index
    %c0_0 = arith.constant 0 : index
    %0 = vector.load %arg1[%c0, %c0_0] : memref<8x11xf32, #tpu.memory_space<vmem>>, vector<8x11xf32>
    %c0_1 = arith.constant 0 : index
    %c0_2 = arith.constant 0 : index
    %1 = vector.load %arg2[%c0_1, %c0_2] : memref<11x128xf32, #tpu.memory_space<vmem>>, vector<11x128xf32>
    %cst = arith.constant dense<0.000000e+00> : vector<8x128xf32>
    %2 = tpu.matmul %0, %1, %cst {dimension_numbers = #tpu.dot_dimension_numbers<[1], [0], [0], [1], [0, 0, 1, 1], [], []>} : vector<8x11xf32>, vector<11x128xf32>, vector<8x128xf32> -> vector<8x128xf32>
    %c0_3 = arith.constant 0 : index
    %c0_4 = arith.constant 0 : index
    %3 = vector.load %arg3[%c0_3, %c0_4] : memref<1x128xf32, #tpu.memory_space<vmem>>, vector<1x128xf32>
    %4 = vector.broadcast %3 : vector<1x128xf32> to vector<8x128xf32>
    %5 = arith.addf %2, %4 : vector<8x128xf32>
    %cst_5 = arith.constant 0.000000e+00 : f32
    %6 = vector.broadcast %cst_5 : f32 to vector<8x128xf32>
    %7 = arith.maximumf %5, %6 : vector<8x128xf32>
    %c0_6 = arith.constant 0 : index
    %c0_7 = arith.constant 0 : index
    %8 = vector.load %arg4[%c0_6, %c0_7] : memref<128x128xf32, #tpu.memory_space<vmem>>, vector<128x128xf32>
    %cst_8 = arith.constant dense<0.000000e+00> : vector<8x128xf32>
    %9 = tpu.matmul %7, %8, %cst_8 {dimension_numbers = #tpu.dot_dimension_numbers<[1], [0], [0], [1], [0, 0, 1, 1], [], []>} : vector<8x128xf32>, vector<128x128xf32>, vector<8x128xf32> -> vector<8x128xf32>
    %c0_9 = arith.constant 0 : index
    %c0_10 = arith.constant 0 : index
    %10 = vector.load %arg5[%c0_9, %c0_10] : memref<1x128xf32, #tpu.memory_space<vmem>>, vector<1x128xf32>
    %11 = vector.broadcast %10 : vector<1x128xf32> to vector<8x128xf32>
    %12 = arith.addf %9, %11 : vector<8x128xf32>
    %c0_11 = arith.constant 0 : index
    %c0_12 = arith.constant 0 : index
    %13 = vector.load %arg6[%c0_11, %c0_12] : memref<8x128xf32, #tpu.memory_space<vmem>>, vector<8x128xf32>
    tpu.vector_store %arg6[%c0_11, %c0_12], %12 {strides = array<i32>} : memref<8x128xf32, #tpu.memory_space<vmem>>, vector<8x128xf32>,
    return
  }
  func.func @transform_0(%arg0: i32) -> (i32, i32) {
    %c0_i32 = arith.constant 0 : i32
    %c0_i32_0 = arith.constant 0 : i32
    return %arg0, %c0_i32 : i32, i32
  }
  func.func @transform_1(%arg0: i32) -> (i32, i32) {
    %c0_i32 = arith.constant 0 : i32
    %c0_i32_0 = arith.constant 0 : i32
    %c0_i32_1 = arith.constant 0 : i32
    return %c0_i32, %c0_i32_0 : i32, i32
  }
  func.func @transform_2(%arg0: i32) -> (i32, i32) {
    %c0_i32 = arith.constant 0 : i32
    %c0_i32_0 = arith.constant 0 : i32
    %c0_i32_1 = arith.constant 0 : i32
    return %c0_i32, %c0_i32_0 : i32, i32
  }
  func.func @transform_3(%arg0: i32) -> (i32, i32) {
    %c0_i32 = arith.constant 0 : i32
    %c0_i32_0 = arith.constant 0 : i32
    %c0_i32_1 = arith.constant 0 : i32
    return %c0_i32, %c0_i32_0 : i32, i32
  }
  func.func @transform_4(%arg0: i32) -> (i32, i32) {
    %c0_i32 = arith.constant 0 : i32
    %c0_i32_0 = arith.constant 0 : i32
    %c0_i32_1 = arith.constant 0 : i32
    return %c0_i32, %c0_i32_0 : i32, i32
  }
  func.func @transform_5(%arg0: i32) -> (i32, i32) {
    %c0_i32 = arith.constant 0 : i32
    %c0_i32_0 = arith.constant 0 : i32
    return %arg0, %c0_i32 : i32, i32
  }
}

</mosaic_0001>

<llo_original>
// kernel: qnet_forward.1
$region0: #{qnet_forward.1}
  #allocation0 [shape = 'u32[]', space=smem, size = 0x4, offset = 0x4, fixed_abs, tag = 'smem constant byte address 0x4 - core index']
  #allocation1 [shape = 'u32[72,128]{1,0:T(1,128)}', space=vmem, size = 0x9000, scoped, tag = 'internal scratch']
  %s0 = inlined_call_operand.vmem [shape: f32[8,11], index: 0, kind: input, shape index: {}]
  %s1 = inlined_call_operand.hbm [shape: f32[11,128], index: 1, kind: input, shape index: {}]
  %s2 = inlined_call_operand.vmem [shape: f32[1,128], index: 2, kind: input, shape index: {}]
  %s3 = inlined_call_operand.hbm [shape: f32[128,128], index: 3, kind: input, shape index: {}]
  %s4 = inlined_call_operand.vmem [shape: f32[1,128], index: 4, kind: input, shape index: {}]
  %s5 = inlined_call_operand.vmem [shape: f32[8,128], index: 5, kind: output, shape index: {}]
  %s6 = sld [smem:[#allocation0]]
  $region38: #{qnet_forward.1} parent=0
    _
  %s8 = ssub.s32 1, %s6
  %s9 = scalar_select 0, %s8, %s6
  $region1: #{qnet_forward.1} parent=0
    #allocation2 [shape = 'u8[8192]{0}', space=vmem, size = 0x2000, scoped, tag = 'input window, operand 1, single buffered']
    #allocation3 [shape = 's32[1]{0}', space=sflag, size = 0x4, scoped, tag = 'scoped memory for qnet_forward.1']
    #allocation4 [shape = 'u8[65536]{0}', space=vmem, size = 0x10000, scoped, tag = 'input window, operand 3, single buffered']
    #allocation5 [shape = 's32[1]{0}', space=sflag, size = 0x4, scoped, tag = 'scoped memory for qnet_forward.1']
    %10 = vsyncpa [#allocation3], 0
    %11 = vsyncpa [#allocation5], 0
    // Predicated region
    $region2: #{qnet_forward.1} parent=1 // pred_check
      _
    $region3: #{qnet_forward.1} parent=1 // pred_check_branch
      %13 = sbr.rel (0) target = $region5
    $region4: #{qnet_forward.1} parent=1 // pred_region
      _
    $region5: #{qnet_forward.1} parent=1 // pred_fallthru
      _
    // Predicated region
    $region6: #{qnet_forward.1} parent=1 // pred_check
      _
    $region7: #{qnet_forward.1} parent=1 // pred_check_branch
      %15 = sbr.rel (0) target = $region9
    $region8: #{qnet_forward.1} parent=1 // pred_region
      %17 = vsyncadd [#allocation3], 0
      %s18 = sshll.u32 %s1, 4
      %s19 = int_to_ptr.hbm [resolvable:$true] %s18
      %s20 = sshll.u32 [#allocation2], 4
      %s21 = int_to_ptr.vmem [resolvable:$true] %s20
      %26 = dma.hbm_to_vmem [thread:$0]  %s19, 256, %s21, [#allocation3], 128, 128, 8
    $region9: #{qnet_forward.1} parent=1 // pred_fallthru
      _
    // Predicated region
    $region10: #{qnet_forward.1} parent=1 // pred_check
      _
    $region11: #{qnet_forward.1} parent=1 // pred_check_branch
      %28 = sbr.rel (0) target = $region13
    $region12: #{qnet_forward.1} parent=1 // pred_region
      _
    $region13: #{qnet_forward.1} parent=1 // pred_fallthru
      _
    // Predicated region
    $region14: #{qnet_forward.1} parent=1 // pred_check
      _
    $region15: #{qnet_forward.1} parent=1 // pred_check_branch
      %30 = sbr.rel (0) target = $region17
    $region16: #{qnet_forward.1} parent=1 // pred_region
      %32 = vsyncadd [#allocation5], 0
      %s33 = sshll.u32 %s3, 4
      %s34 = int_to_ptr.hbm [resolvable:$true] %s33
      %s35 = sshll.u32 [#allocation4], 4
      %s36 = int_to_ptr.vmem [resolvable:$true] %s35
      %41 = dma.hbm_to_vmem [thread:$0]  %s34, 2048, %s36, [#allocation5], 128, 128, 8
    $region17: #{qnet_forward.1} parent=1 // pred_fallthru
      _
    // Predicated region
    $region18: #{qnet_forward.1} parent=1 // pred_check
      _
    $region19: #{qnet_forward.1} parent=1 // pred_check_branch
      %43 = sbr.rel (0) target = $region21
    $region20: #{qnet_forward.1} parent=1 // pred_region
      _
    $region21: #{qnet_forward.1} parent=1 // pred_fallthru
      _
    // Predicated region
    $region22: #{qnet_forward.1} parent=1 // pred_check
      _
    $region23: #{qnet_forward.1} parent=1 // pred_check_branch
      %45 = sbr.rel (0) target = $region25
    $region24: #{qnet_forward.1} parent=1 // pred_region
      %47 = dma.done [#allocation3], 256
    $region25: #{qnet_forward.1} parent=1 // pred_fallthru
      _
    // Predicated region
    $region26: #{qnet_forward.1} parent=1 // pred_check
      _
    $region27: #{qnet_forward.1} parent=1 // pred_check_branch
      %49 = sbr.rel (0) target = $region29
    $region28: #{qnet_forward.1} parent=1 // pred_region
      %51 = dma.done [#allocation5], 2048
    $region29: #{qnet_forward.1} parent=1 // pred_fallthru
      _
    %v52 = vld [vmem:[%s0] sm:$0xff]
    %v53 = vld [vmem:[#allocation2] sm:$0xff]
    %v54 = vld [vmem:[#allocation2 + $0x8] sm:$0x7]
    %v55 = vld [vmem:[%s2] sm:$0x1]
    %v57 = vperm.slane %v55, 0
    %vm59 = vcmask 89088
    %v61 = vsel %vm59, %v52, 0
    %vm63 = vcmask 1042432
    %v65 = vsel %vm63, %v54, 0
    %67 = vmatpush.msra.mxu0 0.0
    %68 = vmatpush.msra.mxu0 0.0
    %69 = vmatpush.msra.mxu0 0.0
    %70 = vmatpush.msra.mxu0 0.0
    %71 = vmatpush.msra.mxu0 0.0
    %72 = vmatpush.msra.mxu0 0.0
    %73 = vmatpush.msra.mxu0 0.0
    %74 = vmatpush.msra.mxu0 0.0
    %75 = vmatpush.msra.mxu0 0.0
    %76 = vmatpush.msra.mxu0 0.0
    %77 = vmatpush.msra.mxu0 0.0
    %78 = vmatpush.msra.mxu0 0.0
    %79 = vmatpush.msra.mxu0 0.0
    %80 = vmatpush.msra.mxu0 0.0
    %81 = vmatpush.msra.mxu0 %v65
    %82 = vmatpush.msra.mxu0 %v53
    %83 = vmatmul.f32.gmra.mxu0 %v61
    %v84 = vpop.f32.mrf.mxu0
    %v85 = vadd.f32 %v57, %v84
    %86 = vdwg.mxu0
    %v87 = vmax.f32 %v85, 0.0
    %v88 = vld [vmem:[#allocation4] sm:$0xff]
    %v89 = vld [vmem:[#allocation4 + $0x8] sm:$0xff]
    %v90 = vld [vmem:[#allocation4 + $0x10] sm:$0xff]
    %v91 = vld [vmem:[#allocation4 + $0x18] sm:$0xff]
    %v92 = vld [vmem:[#allocation4 + $0x20] sm:$0xff]
    %v93 = vld [vmem:[#allocation4 + $0x28] sm:$0xff]
    %v94 = vld [vmem:[#allocation4 + $0x30] sm:$0xff]
    %v95 = vld [vmem:[#allocation4 + $0x38] sm:$0xff]
    %v96 = vld [vmem:[#allocation4 + $0x40] sm:$0xff]
    %v97 = vld [vmem:[#allocation4 + $0x48] sm:$0xff]
    %v98 = vld [vmem:[#allocation4 + $0x50] sm:$0xff]
    %v99 = vld [vmem:[#allocation4 + $0x58] sm:$0xff]
    %v100 = vld [vmem:[#allocation4 + $0x60] sm:$0xff]
    %v101 = vld [vmem:[#allocation4 + $0x68] sm:$0xff]
    %v102 = vld [vmem:[#allocation4 + $0x70] sm:$0xff]
    %v103 = vld [vmem:[#allocation4 + $0x78] sm:$0xff]
    %v104 = vld [vmem:[%s4] sm:$0x1]
    %v106 = vperm.slane %v104, 0
    %108 = vmatpush.msra.mxu0 %v103
    %109 = vmatpush.msra.mxu0 %v102
    %110 = vmatpush.msra.mxu0 %v101
    %111 = vmatpush.msra.mxu0 %v100
    %112 = vmatpush.msra.mxu0 %v99
    %113 = vmatpush.msra.mxu0 %v98
    %114 = vmatpush.msra.mxu0 %v97
    %115 = vmatpush.msra.mxu0 %v96
    %116 = vmatpush.msra.mxu0 %v95
    %117 = vmatpush.msra.mxu0 %v94
    %118 = vmatpush.msra.mxu0 %v93
    %119 = vmatpush.msra.mxu0 %v92
    %120 = vmatpush.msra.mxu0 %v91
    %121 = vmatpush.msra.mxu0 %v90
    %122 = vmatpush.msra.mxu0 %v89
    %123 = vmatpush.msra.mxu0 %v88
    %124 = vmatmul.f32.gmra.mxu0 %v87
    %v125 = vpop.f32.mrf.mxu0
    %v126 = vadd.f32 %v106, %v125
    %127 = vdwg.mxu0
    %128 = vst [vmem:[%s5] sm:$0xff] %v126
    // Predicated region
    $region30: #{qnet_forward.1} parent=1 // pred_check
      _
    $region31: #{qnet_forward.1} parent=1 // pred_check_branch
      %130 = sbr.rel (0) target = $region33
    $region32: #{qnet_forward.1} parent=1 // pred_region
      _
    $region33: #{qnet_forward.1} parent=1 // pred_fallthru
      _
    // Predicated region
    $region34: #{qnet_forward.1} parent=1 // pred_check
      _
    $region35: #{qnet_forward.1} parent=1 // pred_check_branch
      %132 = sbr.rel (0) target = $region37
    $region36: #{qnet_forward.1} parent=1 // pred_region
      _
    $region37: #{qnet_forward.1} parent=1 // pred_fallthru
      _
    %133 = vsyncpa [#allocation3], 1
    %134 = vsyncpa [#allocation5], 1

</llo_original>
